<compile_context>
chip_gen: v7x
topology: tpu7x:2x2x1
jax: 0.10.0
libtpu: 0.0.40
codegen_flags: <defaults>
</compile_context>

<pallas_src>
import functools

import jax
import jax.numpy as jnp
from jax.experimental import pallas as pl
from jax.experimental.pallas import tpu as pltpu


def resblock_kernel(x_ref, wT_ref, b_ref, o_ref, *, mxu_bf16: bool):
    """One batch tile of the ResBlock in feature-major layout.

    x_ref : (N, B_TILE)  input tile (batch on the 128-lane axis -> lane-dense I/O)
    wT_ref: (F, N, N)    per-layer weights, pre-transposed: h_new = wT[i] @ h
    b_ref : (F, N, 1)    per-layer biases (broadcast along the lane/batch axis)
    o_ref : (N, B_TILE)  output tile
    """
    x = x_ref[...].astype(jnp.float32)
    h = x
    num_fc = wT_ref.shape[0]
    for i in range(num_fc):  # num_fc is static -> unrolled
        w = wT_ref[i]
        if mxu_bf16:
            lhs = w.astype(jnp.bfloat16)
            rhs = h.astype(jnp.bfloat16)
        else:
            lhs = w.astype(jnp.float32)
            rhs = h
        # MXU matmul, f32 accumulation.
        h = jnp.dot(lhs, rhs, preferred_element_type=jnp.float32)
        # f32 epilogue (bias / tanh) -> no bf16 VPU/EUP dependence (v5e-safe).
        h = h + b_ref[i].astype(jnp.float32)
        if i < num_fc - 1:
            h = jnp.tanh(h)
    # residual add + final activation, lane-dense store.
    o_ref[...] = jnp.tanh(h + x).astype(o_ref.dtype)


def resblock(x, w_stack, b_stack, *, b_tile=512, mxu_bf16=True):
    """ResBlock forward.

    x:       (B, N)        batch-major input (PyTorch nn.Linear convention)
    w_stack: (F, N_in, N_out)  stacked weights such that layer i is  h @ w_stack[i] + b
    b_stack: (F, N)        stacked biases
    returns  (B, N)
    """
    B, N = x.shape
    F = w_stack.shape[0]

    LANE = 128
    # Batch tile: multiple of 128 lanes, capped by the (rounded-up) batch size.
    b_tile = max(LANE, min(int(b_tile), pl.cdiv(B, LANE) * LANE))
    b_tile = (b_tile // LANE) * LANE
    Bp = pl.cdiv(B, b_tile) * b_tile  # zero-pad the batch to a whole number of tiles

    # Feature-major layout: batch on the lane axis. Zero padding is safe because
    # every batch column is computed independently (no cross-column reduction).
    xt = jnp.pad(x.T, ((0, 0), (0, Bp - B)))          # (N, Bp)
    wT = jnp.transpose(w_stack, (0, 2, 1))            # (F, N_out, N_in): h' = wT @ h
    bT = b_stack.reshape(F, N, 1)                     # broadcast along lanes

    kernel = functools.partial(resblock_kernel, mxu_bf16=mxu_bf16)
    out_t = pl.pallas_call(
        kernel,
        out_shape=jax.ShapeDtypeStruct((N, Bp), x.dtype),
        grid=(Bp // b_tile,),
        in_specs=[
            pl.BlockSpec((N, b_tile), lambda i: (0, i)),        # streamed per tile
            pl.BlockSpec((F, N, N), lambda i: (0, 0, 0)),       # resident weights
            pl.BlockSpec((F, N, 1), lambda i: (0, 0, 0)),       # resident biases
        ],
        out_specs=pl.BlockSpec((N, b_tile), lambda i: (0, i)),
        compiler_params=pltpu.CompilerParams(
            # Batch tiles are independent -> shard across TensorCores on v7x.
            dimension_semantics=("parallel",),
        ),
    )(xt, wT, bT)

    return out_t[:, :B].T


def resblock_ref(x, w_stack, b_stack):
    """Pure-JAX f32 reference (mirrors the PyTorch forward)."""
    h = x.astype(jnp.float32)
    F = w_stack.shape[0]
    for i in range(F):
        h = h @ w_stack[i] + b_stack[i]
        if i < F - 1:
            h = jnp.tanh(h)
    return jnp.tanh(h + x.astype(jnp.float32)).astype(x.dtype)


if __name__ == "__main__":
    # Small shapes consistent with the module: ResBlock(num_node=32, num_fc=3)
    batch, num_node, num_fc = 8, 32, 3

    key = jax.random.PRNGKey(0)
    kx, kw, kb = jax.random.split(key, 3)

    x = jax.random.normal(kx, (batch, num_node), dtype=jnp.float32)

    # Deterministic parameter init (PyTorch-Linear-like uniform range), stacked.
    bound = 1.0 / (num_node ** 0.5)
    w_stack = jax.random.uniform(
        kw, (num_fc, num_node, num_node), jnp.float32, -bound, bound
    )
    b_stack = jax.random.uniform(
        kb, (num_fc, num_node), jnp.float32, -bound, bound
    )

    ref = resblock_ref(x, w_stack, b_stack)

    # Default path: bf16 MXU operands, f32 accumulate/epilogue (loosened tolerance).
    out = resblock(x, w_stack, b_stack)
    jax.block_until_ready(out)
    assert out.shape == (batch, num_node)
    assert jnp.allclose(out, ref, atol=5e-2, rtol=5e-2), "bf16-MXU mismatch vs reference"

    # Full-f32 path: tight tolerance sanity check of the kernel structure.
    out_f32 = resblock(x, w_stack, b_stack, mxu_bf16=False)
    jax.block_until_ready(out_f32)
    assert jnp.allclose(out_f32, ref, atol=1e-5, rtol=1e-5), "f32 mismatch vs reference"

    print("KERNEL_OK")
</pallas_src>

<mosaic_0001>
module attributes {stable_mosaic.version = 11 : i64} {
  func.func @resblock_kernel(%arg0: i32, %arg1: memref<32x128xf32, #tpu.memory_space<vmem>>, %arg2: memref<3x32x32xf32, #tpu.memory_space<vmem>>, %arg3: memref<3x32x1xf32, #tpu.memory_space<vmem>>, %arg4: memref<32x128xf32, #tpu.memory_space<vmem>>) attributes {dimension_semantics = [#tpu.dimension_semantics<parallel>], iteration_bounds = array<i64: 1>, scalar_prefetch = 0 : i64, scratch_operands = 0 : i64, tpu.core_type = #tpu.core_type<tc>, window_params = [{transform_indices = @transform_0, window_bounds = array<i64: 32, 128>}, {pipeline_mode = #tpu.pipeline_mode<synchronous>, transform_indices = @transform_1, window_bounds = array<i64: 3, 32, 32>}, {pipeline_mode = #tpu.pipeline_mode<synchronous>, transform_indices = @transform_2, window_bounds = array<i64: 3, 32, 1>}, {transform_indices = @transform_3, window_bounds = array<i64: 32, 128>}]} {
    %c0 = arith.constant 0 : index
    %c0_0 = arith.constant 0 : index
    %0 = vector.load %arg1[%c0, %c0_0] : memref<32x128xf32, #tpu.memory_space<vmem>>, vector<32x128xf32>
    %c0_1 = arith.constant 0 : index
    %c0_2 = arith.constant 0 : index
    %c0_3 = arith.constant 0 : index
    %1 = vector.load %arg2[%c0_1, %c0_2, %c0_3] : memref<3x32x32xf32, #tpu.memory_space<vmem>>, vector<1x32x32xf32>
    %2 = vector.shape_cast %1 : vector<1x32x32xf32> to vector<32x32xf32>
    %3 = arith.truncf %2 : vector<32x32xf32> to vector<32x32xbf16>
    %4 = arith.truncf %0 : vector<32x128xf32> to vector<32x128xbf16>
    %cst = arith.constant dense<0.000000e+00> : vector<32x128xf32>
    %5 = tpu.matmul %3, %4, %cst {dimension_numbers = #tpu.dot_dimension_numbers<[1], [0], [0], [1], [0, 0, 1, 1], [], []>} : vector<32x32xbf16>, vector<32x128xbf16>, vector<32x128xf32> -> vector<32x128xf32>
    %c0_4 = arith.constant 0 : index
    %c0_5 = arith.constant 0 : index
    %c0_6 = arith.constant 0 : index
    %6 = vector.load %arg3[%c0_4, %c0_5, %c0_6] : memref<3x32x1xf32, #tpu.memory_space<vmem>>, vector<1x32x1xf32>
    %7 = vector.shape_cast %6 : vector<1x32x1xf32> to vector<32x1xf32>
    %8 = vector.broadcast %7 : vector<32x1xf32> to vector<32x128xf32>
    %9 = arith.addf %5, %8 : vector<32x128xf32>
    %10 = math.tanh %9 : vector<32x128xf32>
    %c1 = arith.constant 1 : index
    %c0_7 = arith.constant 0 : index
    %c0_8 = arith.constant 0 : index
    %11 = vector.load %arg2[%c1, %c0_7, %c0_8] : memref<3x32x32xf32, #tpu.memory_space<vmem>>, vector<1x32x32xf32>
    %12 = vector.shape_cast %11 : vector<1x32x32xf32> to vector<32x32xf32>
    %13 = arith.truncf %12 : vector<32x32xf32> to vector<32x32xbf16>
    %14 = arith.truncf %10 : vector<32x128xf32> to vector<32x128xbf16>
    %cst_9 = arith.constant dense<0.000000e+00> : vector<32x128xf32>
    %15 = tpu.matmul %13, %14, %cst_9 {dimension_numbers = #tpu.dot_dimension_numbers<[1], [0], [0], [1], [0, 0, 1, 1], [], []>} : vector<32x32xbf16>, vector<32x128xbf16>, vector<32x128xf32> -> vector<32x128xf32>
    %c1_10 = arith.constant 1 : index
    %c0_11 = arith.constant 0 : index
    %c0_12 = arith.constant 0 : index
    %16 = vector.load %arg3[%c1_10, %c0_11, %c0_12] : memref<3x32x1xf32, #tpu.memory_space<vmem>>, vector<1x32x1xf32>
    %17 = vector.shape_cast %16 : vector<1x32x1xf32> to vector<32x1xf32>
    %18 = vector.broadcast %17 : vector<32x1xf32> to vector<32x128xf32>
    %19 = arith.addf %15, %18 : vector<32x128xf32>
    %20 = math.tanh %19 : vector<32x128xf32>
    %c2 = arith.constant 2 : index
    %c0_13 = arith.constant 0 : index
    %c0_14 = arith.constant 0 : index
    %21 = vector.load %arg2[%c2, %c0_13, %c0_14] : memref<3x32x32xf32, #tpu.memory_space<vmem>>, vector<1x32x32xf32>
    %22 = vector.shape_cast %21 : vector<1x32x32xf32> to vector<32x32xf32>
    %23 = arith.truncf %22 : vector<32x32xf32> to vector<32x32xbf16>
    %24 = arith.truncf %20 : vector<32x128xf32> to vector<32x128xbf16>
    %cst_15 = arith.constant dense<0.000000e+00> : vector<32x128xf32>
    %25 = tpu.matmul %23, %24, %cst_15 {dimension_numbers = #tpu.dot_dimension_numbers<[1], [0], [0], [1], [0, 0, 1, 1], [], []>} : vector<32x32xbf16>, vector<32x128xbf16>, vector<32x128xf32> -> vector<32x128xf32>
    %c2_16 = arith.constant 2 : index
    %c0_17 = arith.constant 0 : index
    %c0_18 = arith.constant 0 : index
    %26 = vector.load %arg3[%c2_16, %c0_17, %c0_18] : memref<3x32x1xf32, #tpu.memory_space<vmem>>, vector<1x32x1xf32>
    %27 = vector.shape_cast %26 : vector<1x32x1xf32> to vector<32x1xf32>
    %28 = vector.broadcast %27 : vector<32x1xf32> to vector<32x128xf32>
    %29 = arith.addf %25, %28 : vector<32x128xf32>
    %30 = arith.addf %29, %0 : vector<32x128xf32>
    %31 = math.tanh %30 : vector<32x128xf32>
    %c0_19 = arith.constant 0 : index
    %c0_20 = arith.constant 0 : index
    %32 = vector.load %arg4[%c0_19, %c0_20] : memref<32x128xf32, #tpu.memory_space<vmem>>, vector<32x128xf32>
    tpu.vector_store %arg4[%c0_19, %c0_20], %31 {strides = array<i32>} : memref<32x128xf32, #tpu.memory_space<vmem>>, vector<32x128xf32>,
    return
  }
  func.func @transform_0(%arg0: i32) -> (i32, i32) {
    %c0_i32 = arith.constant 0 : i32
    %c0_i32_0 = arith.constant 0 : i32
    return %c0_i32, %arg0 : i32, i32
  }
  func.func @transform_1(%arg0: i32) -> (i32, i32, i32) {
    %c0_i32 = arith.constant 0 : i32
    %c0_i32_0 = arith.constant 0 : i32
    %c0_i32_1 = arith.constant 0 : i32
    %c0_i32_2 = arith.constant 0 : i32
    return %c0_i32, %c0_i32_0, %c0_i32_1 : i32, i32, i32
  }
  func.func @transform_2(%arg0: i32) -> (i32, i32, i32) {
    %c0_i32 = arith.constant 0 : i32
    %c0_i32_0 = arith.constant 0 : i32
    %c0_i32_1 = arith.constant 0 : i32
    %c0_i32_2 = arith.constant 0 : i32
    return %c0_i32, %c0_i32_0, %c0_i32_1 : i32, i32, i32
  }
  func.func @transform_3(%arg0: i32) -> (i32, i32) {
    %c0_i32 = arith.constant 0 : i32
    %c0_i32_0 = arith.constant 0 : i32
    return %c0_i32, %arg0 : i32, i32
  }
}

</mosaic_0001>

<llo_original>
// kernel: tpu_custom_call.1
$region0: #{tpu_custom_call.1}
  #allocation0 [shape = 'u32[]', space=smem, size = 0x4, offset = 0x4, fixed_abs, tag = 'smem constant byte address 0x4 - core index']
  #allocation1 [shape = 'u32[144,128]{1,0:T(1,128)}', space=vmem, size = 0x12000, scoped, tag = 'internal scratch']
  %s0 = inlined_call_operand.hbm [shape: f32[32,128], index: 0, kind: input, shape index: {}]
  %s1 = inlined_call_operand.vmem [shape: f32[3,32,32], index: 1, kind: input, shape index: {}]
  %s2 = inlined_call_operand.vmem [shape: f32[3,32,1], index: 2, kind: input, shape index: {}]
  %s3 = inlined_call_operand.hbm [shape: f32[32,128], index: 3, kind: output, shape index: {}]
  %s4 = sld [smem:[#allocation0]]
  $region26: #{tpu_custom_call.1} parent=0
    _
  %s6 = ssub.s32 1, %s4
  %s7 = scalar_select 0, %s6, %s4
  $region1: #{tpu_custom_call.1} parent=0
    #allocation2 [shape = 'u8[16384]{0}', space=vmem, size = 0x4000, scoped, tag = 'input window, operand 0, single buffered']
    #allocation3 [shape = 's32[1]{0}', space=sflag, size = 0x4, scoped, tag = 'scoped memory for tpu_custom_call.1']
    #allocation4 [shape = 's32[1]{0}', space=sflag, size = 0x4, scoped, tag = 'scoped memory for tpu_custom_call.1']
    #allocation5 [shape = 'u8[16384]{0}', space=vmem, size = 0x4000, scoped, tag = 'output window, operand 0, single buffered']
    %8 = vsyncpa [#allocation3], 0
    %9 = vsyncpa [#allocation4], 0
    // Predicated region
    $region2: #{tpu_custom_call.1} parent=1 // pred_check
      _
    $region3: #{tpu_custom_call.1} parent=1 // pred_check_branch
      %11 = sbr.rel (0) target = $region5
    $region4: #{tpu_custom_call.1} parent=1 // pred_region
      %s13 = ssub.s32 512, 512
      %14 = vsyncadd [#allocation3], %s13
      %s15 = sshll.u32 [#allocation2], 4
      %s16 = int_to_ptr.vmem [resolvable:$true] %s15
      %21 = dma.hbm_to_vmem [thread:$0]  %s0, 512, %s16, [#allocation3], 128, 128, 8
    $region5: #{tpu_custom_call.1} parent=1 // pred_fallthru
      _
    // Predicated region
    $region6: #{tpu_custom_call.1} parent=1 // pred_check
      _
    $region7: #{tpu_custom_call.1} parent=1 // pred_check_branch
      %23 = sbr.rel (0) target = $region9
    $region8: #{tpu_custom_call.1} parent=1 // pred_region
      _
    $region9: #{tpu_custom_call.1} parent=1 // pred_fallthru
      _
    // Predicated region
    $region10: #{tpu_custom_call.1} parent=1 // pred_check
      _
    $region11: #{tpu_custom_call.1} parent=1 // pred_check_branch
      %25 = sbr.rel (0) target = $region13
    $region12: #{tpu_custom_call.1} parent=1 // pred_region
      _
    $region13: #{tpu_custom_call.1} parent=1 // pred_fallthru
      _
    // Predicated region
    $region14: #{tpu_custom_call.1} parent=1 // pred_check
      _
    $region15: #{tpu_custom_call.1} parent=1 // pred_check_branch
      %27 = sbr.rel (0) target = $region17
    $region16: #{tpu_custom_call.1} parent=1 // pred_region
      %28 = dma.done [#allocation3], 512
    $region17: #{tpu_custom_call.1} parent=1 // pred_fallthru
      _
    %v30 = vld [vmem:[#allocation2] sm:$0xff]
    %v31 = vld [vmem:[#allocation2 + $0x8] sm:$0xff]
    %v32 = vld [vmem:[#allocation2 + $0x10] sm:$0xff]
    %v33 = vld [vmem:[#allocation2 + $0x18] sm:$0xff]
    %v34 = vld [vmem:[%s1] sm:$0xff]
    %v35 = vld [vmem:[%s1 + $0x8] sm:$0xff]
    %v36 = vld [vmem:[%s1 + $0x10] sm:$0xff]
    %v37 = vld [vmem:[%s1 + $0x18] sm:$0xff]
    %v38 = vpack.c.bf16 %v35, %v34
    %v39 = vpack.c.bf16 %v37, %v36
    %v40 = vpack.c.bf16 %v31, %v30
    %v41 = vpack.c.bf16 %v33, %v32
    %v42 = vld [vmem:[%s2] sm:$0xff]
    %v43 = vld [vmem:[%s2 + $0x8] sm:$0xff]
    %v44 = vld [vmem:[%s2 + $0x10] sm:$0xff]
    %v45 = vld [vmem:[%s2 + $0x18] sm:$0xff]
    %47 = vset.pattern.permute.xlu0 0
    %48 = vperm.xlu0 %47, %v42
    %v49 = vpop.permute.xlu0 %48
    %52 = vset.pattern.permute.xlu0 0
    %53 = vperm.xlu0 %52, %v43
    %v54 = vpop.permute.xlu0 %53
    %57 = vset.pattern.permute.xlu0 0
    %58 = vperm.xlu0 %57, %v44
    %v59 = vpop.permute.xlu0 %58
    %62 = vset.pattern.permute.xlu0 0
    %63 = vperm.xlu0 %62, %v45
    %v64 = vpop.permute.xlu0 %63
    %vm66 = vcmask 261120
    %v68 = vsel %vm66, %v38, 0
    %v71 = vsel %vm66, %v39, 0
    %73 = vmatprep.subr.bf16.mxu0 0
    %74 = vmatpush1.bf16.msra.mxu0 %v40
    %75 = vmatprep.subr.bf16.mxu0 0
    %76 = vmatpush1.bf16.msra.mxu0 %v41
    %77 = vmatprep.subr.bf16.mxu0 0
    %78 = vmatpush1.bf16.msra.mxu0 0
    %79 = vmatprep.subr.bf16.mxu0 0
    %80 = vmatpush1.bf16.msra.mxu0 0
    %81 = vmatprep.subr.bf16.mxu0 0
    %82 = vmatpush1.bf16.msra.mxu0 0
    %83 = vmatprep.subr.bf16.mxu0 0
    %84 = vmatpush1.bf16.msra.mxu0 0
    %85 = vmatprep.subr.bf16.mxu0 0
    %86 = vmatpush1.bf16.msra.mxu0 0
    %87 = vmatprep.subr.bf16.mxu0 0
    %88 = vmatpush1.bf16.msra.mxu0 0
    %89 = vmatprep.subr.bf16.mxu0 0
    %90 = vmatpush1.bf16.msra.mxu0 0
    %91 = vmatprep.subr.bf16.mxu0 0
    %92 = vmatpush1.bf16.msra.mxu0 0
    %93 = vmatprep.subr.bf16.mxu0 0
    %94 = vmatpush1.bf16.msra.mxu0 0
    %95 = vmatprep.subr.bf16.mxu0 0
    %96 = vmatpush1.bf16.msra.mxu0 0
    %97 = vmatprep.subr.bf16.mxu0 0
    %98 = vmatpush1.bf16.msra.mxu0 0
    %99 = vmatprep.subr.bf16.mxu0 0
    %100 = vmatpush1.bf16.msra.mxu0 0
    %101 = vmatprep.subr.bf16.mxu0 0
    %102 = vmatpush1.bf16.msra.mxu0 0
    %103 = vmatprep.subr.bf16.mxu0 0
    %104 = vmatpush1.bf16.msra.mxu0 0
    %105 = vmatprep.mubr.bf16.mxu0 0
    %106 = vmatmul.mubr.bf16.gmra.mrb[0].mxu0 %v68
    %v107 = vpop.f32.mrb[0].mxu0
    %v108 = vadd.f32 %v49, %v107
    %v109 = vpop.f32.mrb[0].mxu0
    %v110 = vpop.f32.mrb[0].mxu0
    %v111 = vadd.f32 %v54, %v110
    %v112 = vpop.f32.mrb[0].mxu0
    %113 = vmatprep.mubr.bf16.mxu0 0
    %114 = vmatmul.mubr.bf16.gmra.mrb[0].mxu0 %v71
    %v115 = vpop.f32.mrb[0].mxu0
    %v116 = vadd.f32 %v59, %v115
    %v117 = vpop.f32.mrb[0].mxu0
    %v118 = vpop.f32.mrb[0].mxu0
    %v119 = vadd.f32 %v64, %v118
    %v120 = vpop.f32.mrb[0].mxu0
    %121 = vdwg.mxu0
    %v122 = vtanh.pop %v108
    %v123 = vtanh.pop %v111
    %v124 = vtanh.pop %v116
    %v125 = vtanh.pop %v119
    %s126 = scalar_lea.vmem %s1, 32
    %v127 = vld [vmem:[%s126] sm:$0xff]
    %v128 = vld [vmem:[%s126 + $0x8] sm:$0xff]
    %v129 = vld [vmem:[%s126 + $0x10] sm:$0xff]
    %v130 = vld [vmem:[%s126 + $0x18] sm:$0xff]
    %v131 = vpack.c.bf16 %v128, %v127
    %v132 = vpack.c.bf16 %v130, %v129
    %v133 = vpack.c.bf16 %v123, %v122
    %v134 = vpack.c.bf16 %v125, %v124
    %s135 = scalar_lea.vmem %s2, 32
    %v136 = vld [vmem:[%s135] sm:$0xff]
    %v137 = vld [vmem:[%s135 + $0x8] sm:$0xff]
    %v138 = vld [vmem:[%s135 + $0x10] sm:$0xff]
    %v139 = vld [vmem:[%s135 + $0x18] sm:$0xff]
    %141 = vset.pattern.permute.xlu0 0
    %142 = vperm.xlu0 %141, %v136
    %v143 = vpop.permute.xlu0 %142
    %146 = vset.pattern.permute.xlu0 0
    %147 = vperm.xlu0 %146, %v137
    %v148 = vpop.permute.xlu0 %147
    %151 = vset.pattern.permute.xlu0 0
    %152 = vperm.xlu0 %151, %v138
    %v153 = vpop.permute.xlu0 %152
    %156 = vset.pattern.permute.xlu0 0
    %157 = vperm.xlu0 %156, %v139
    %v158 = vpop.permute.xlu0 %157
    %v161 = vsel %vm66, %v131, 0
    %v164 = vsel %vm66, %v132, 0
    %166 = vmatprep.subr.bf16.mxu0 0
    %167 = vmatpush1.bf16.msra.mxu0 %v133
    %168 = vmatprep.subr.bf16.mxu0 0
    %169 = vmatpush1.bf16.msra.mxu0 %v134
    %170 = vmatprep.subr.bf16.mxu0 0
    %171 = vmatpush1.bf16.msra.mxu0 0
    %172 = vmatprep.subr.bf16.mxu0 0
    %173 = vmatpush1.bf16.msra.mxu0 0
    %174 = vmatprep.subr.bf16.mxu0 0
    %175 = vmatpush1.bf16.msra.mxu0 0
    %176 = vmatprep.subr.bf16.mxu0 0
    %177 = vmatpush1.bf16.msra.mxu0 0
    %178 = vmatprep.subr.bf16.mxu0 0
    %179 = vmatpush1.bf16.msra.mxu0 0
    %180 = vmatprep.subr.bf16.mxu0 0
    %181 = vmatpush1.bf16.msra.mxu0 0
    %182 = vmatprep.subr.bf16.mxu0 0
    %183 = vmatpush1.bf16.msra.mxu0 0
    %184 = vmatprep.subr.bf16.mxu0 0
    %185 = vmatpush1.bf16.msra.mxu0 0
    %186 = vmatprep.subr.bf16.mxu0 0
    %187 = vmatpush1.bf16.msra.mxu0 0
    %188 = vmatprep.subr.bf16.mxu0 0
    %189 = vmatpush1.bf16.msra.mxu0 0
    %190 = vmatprep.subr.bf16.mxu0 0
    %191 = vmatpush1.bf16.msra.mxu0 0
    %192 = vmatprep.subr.bf16.mxu0 0
    %193 = vmatpush1.bf16.msra.mxu0 0
    %194 = vmatprep.subr.bf16.mxu0 0
    %195 = vmatpush1.bf16.msra.mxu0 0
    %196 = vmatprep.subr.bf16.mxu0 0
    %197 = vmatpush1.bf16.msra.mxu0 0
    %198 = vmatprep.mubr.bf16.mxu0 0
    %199 = vmatmul.mubr.bf16.gmra.mrb[0].mxu0 %v161
    %v200 = vpop.f32.mrb[0].mxu0
    %v201 = vadd.f32 %v143, %v200
    %v202 = vpop.f32.mrb[0].mxu0
    %v203 = vpop.f32.mrb[0].mxu0
    %v204 = vadd.f32 %v148, %v203
    %v205 = vpop.f32.mrb[0].mxu0
    %206 = vmatprep.mubr.bf16.mxu0 0
    %207 = vmatmul.mubr.bf16.gmra.mrb[0].mxu0 %v164
    %v208 = vpop.f32.mrb[0].mxu0
    %v209 = vadd.f32 %v153, %v208
    %v210 = vpop.f32.mrb[0].mxu0
    %v211 = vpop.f32.mrb[0].mxu0
    %v212 = vadd.f32 %v158, %v211
    %v213 = vpop.f32.mrb[0].mxu0
    %214 = vdwg.mxu0
    %v215 = vtanh.pop %v201
    %v216 = vtanh.pop %v204
    %v217 = vtanh.pop %v209
    %v218 = vtanh.pop %v212
    %s219 = scalar_lea.vmem %s1, 64
    %v220 = vld [vmem:[%s219] sm:$0xff]
    %v221 = vld [vmem:[%s219 + $0x8] sm:$0xff]
    %v222 = vld [vmem:[%s219 + $0x10] sm:$0xff]
    %v223 = vld [vmem:[%s219 + $0x18] sm:$0xff]
    %v224 = vpack.c.bf16 %v221, %v220
    %v225 = vpack.c.bf16 %v223, %v222
    %v226 = vpack.c.bf16 %v216, %v215
    %v227 = vpack.c.bf16 %v218, %v217
    %s228 = scalar_lea.vmem %s2, 64
    %v229 = vld [vmem:[%s228] sm:$0xff]
    %v230 = vld [vmem:[%s228 + $0x8] sm:$0xff]
    %v231 = vld [vmem:[%s228 + $0x10] sm:$0xff]
    %v232 = vld [vmem:[%s228 + $0x18] sm:$0xff]
    %234 = vset.pattern.permute.xlu0 0
    %235 = vperm.xlu0 %234, %v229
    %v236 = vpop.permute.xlu0 %235
    %239 = vset.pattern.permute.xlu0 0
    %240 = vperm.xlu0 %239, %v230
    %v241 = vpop.permute.xlu0 %240
    %244 = vset.pattern.permute.xlu0 0
    %245 = vperm.xlu0 %244, %v231
    %v246 = vpop.permute.xlu0 %245
    %249 = vset.pattern.permute.xlu0 0
    %250 = vperm.xlu0 %249, %v232
    %v251 = vpop.permute.xlu0 %250
    %v254 = vsel %vm66, %v224, 0
    %v257 = vsel %vm66, %v225, 0
    %259 = vmatprep.subr.bf16.mxu0 0
    %260 = vmatpush1.bf16.msra.mxu0 %v226
    %261 = vmatprep.subr.bf16.mxu0 0
    %262 = vmatpush1.bf16.msra.mxu0 %v227
    %263 = vmatprep.subr.bf16.mxu0 0
    %264 = vmatpush1.bf16.msra.mxu0 0
    %265 = vmatprep.subr.bf16.mxu0 0
    %266 = vmatpush1.bf16.msra.mxu0 0
    %267 = vmatprep.subr.bf16.mxu0 0
    %268 = vmatpush1.bf16.msra.mxu0 0
    %269 = vmatprep.subr.bf16.mxu0 0
    %270 = vmatpush1.bf16.msra.mxu0 0
    %271 = vmatprep.subr.bf16.mxu0 0
    %272 = vmatpush1.bf16.msra.mxu0 0
    %273 = vmatprep.subr.bf16.mxu0 0
    %274 = vmatpush1.bf16.msra.mxu0 0
    %275 = vmatprep.subr.bf16.mxu0 0
    %276 = vmatpush1.bf16.msra.mxu0 0
    %277 = vmatprep.subr.bf16.mxu0 0
    %278 = vmatpush1.bf16.msra.mxu0 0
    %279 = vmatprep.subr.bf16.mxu0 0
    %280 = vmatpush1.bf16.msra.mxu0 0
    %281 = vmatprep.subr.bf16.mxu0 0
    %282 = vmatpush1.bf16.msra.mxu0 0
    %283 = vmatprep.subr.bf16.mxu0 0
    %284 = vmatpush1.bf16.msra.mxu0 0
    %285 = vmatprep.subr.bf16.mxu0 0
    %286 = vmatpush1.bf16.msra.mxu0 0
    %287 = vmatprep.subr.bf16.mxu0 0
    %288 = vmatpush1.bf16.msra.mxu0 0
    %289 = vmatprep.subr.bf16.mxu0 0
    %290 = vmatpush1.bf16.msra.mxu0 0
    %291 = vmatprep.mubr.bf16.mxu0 0
    %292 = vmatmul.mubr.bf16.gmra.mrb[0].mxu0 %v254
    %v293 = vpop.f32.mrb[0].mxu0
    %v294 = vadd.f32 %v236, %v293
    %v295 = vpop.f32.mrb[0].mxu0
    %v296 = vpop.f32.mrb[0].mxu0
    %v297 = vadd.f32 %v241, %v296
    %v298 = vpop.f32.mrb[0].mxu0
    %299 = vmatprep.mubr.bf16.mxu0 0
    %300 = vmatmul.mubr.bf16.gmra.mrb[0].mxu0 %v257
    %v301 = vpop.f32.mrb[0].mxu0
    %v302 = vadd.f32 %v246, %v301
    %v303 = vpop.f32.mrb[0].mxu0
    %v304 = vpop.f32.mrb[0].mxu0
    %v305 = vadd.f32 %v251, %v304
    %v306 = vpop.f32.mrb[0].mxu0
    %307 = vdwg.mxu0
    %v308 = vadd.f32 %v294, %v30
    %v309 = vadd.f32 %v297, %v31
    %v310 = vadd.f32 %v302, %v32
    %v311 = vadd.f32 %v305, %v33
    %v312 = vtanh.pop %v308
    %v313 = vtanh.pop %v309
    %v314 = vtanh.pop %v310
    %v315 = vtanh.pop %v311
    %316 = vst [vmem:[#allocation5] sm:$0xff] %v312
    %317 = vst [vmem:[#allocation5 + $0x8] sm:$0xff] %v313
    %318 = vst [vmem:[#allocation5 + $0x10] sm:$0xff] %v314
    %319 = vst [vmem:[#allocation5 + $0x18] sm:$0xff] %v315
    // Predicated region
    $region18: #{tpu_custom_call.1} parent=1 // pred_check
      _
    $region19: #{tpu_custom_call.1} parent=1 // pred_check_branch
      %321 = sbr.rel (0) target = $region21
    $region20: #{tpu_custom_call.1} parent=1 // pred_region
      %s323 = ssub.s32 512, 512
      %324 = vsyncadd [#allocation4], %s323
      %s325 = sshll.u32 [#allocation5], 4
      %s326 = int_to_ptr.vmem [resolvable:$true] %s325
      %331 = dma.vmem_to_hbm [thread:$0]  %s326, 512, %s3, [#allocation4], 128, 128, 8
    $region21: #{tpu_custom_call.1} parent=1 // pred_fallthru
      _
    // Predicated region
    $region22: #{tpu_custom_call.1} parent=1 // pred_check
      _
    $region23: #{tpu_custom_call.1} parent=1 // pred_check_branch
      %333 = sbr.rel (0) target = $region25
    $region24: #{tpu_custom_call.1} parent=1 // pred_region
      %334 = dma.done [#allocation4], 512
    $region25: #{tpu_custom_call.1} parent=1 // pred_fallthru
      _
    %335 = vsyncpa [#allocation3], 1
    %336 = vsyncpa [#allocation4], 1

</llo_original>
